<compile_context>
chip_gen: v5e
topology: v5e:2x2
jax: 0.10.0
libtpu: 0.0.40
codegen_flags: <defaults>
</compile_context>

<pallas_src>
from functools import partial

import numpy as np
import jax
import jax.numpy as jnp
from jax.experimental import pallas as pl
from jax.experimental.pallas import tpu as pltpu

NPAD = 128          # node axis padded to one lane-width (128 lanes)
LPAD = 8            # level axis padded to one sublane group
BATCH = 64          # input vectors per genome (8 LHS vregs per weight push)
GENOME_BLOCK = 16   # genomes per grid step (must be even; ~2.1 MiB VMEM per buffer)


def _neat_kernel(h_ref, wt_ref, mask_ref, o_ref, *, num_levels, genome_block):
    # h_ref    : (GB, B, NPAD)     f32  node-state rows
    # wt_ref   : (GB, NPAD, NPAD)  f32  wt[g, src, dst]
    # mask_ref : (GB, LPAD, NPAD)  f32  mask[g, l, n]
    # o_ref    : (GB, B, NPAD)     f32

    # Loop over genome *pairs*: two independent level chains are interleaved per
    # iteration to hide MXU-drain / EUP-tanh latency; the rolled loop bounds live
    # ranges so the two 16-vreg weight tiles + states don't spill.
    @pl.loop(0, genome_block // 2)
    def _(i):
        g0 = 2 * i
        g1 = g0 + 1
        h0 = h_ref[g0]          # (B, NPAD)
        h1 = h_ref[g1]
        w0 = wt_ref[g0]         # (NPAD, NPAD) — hoisted per genome, reused every level
        w1 = wt_ref[g1]
        mk0 = mask_ref[g0]      # (LPAD, NPAD) — 1 vreg each
        mk1 = mask_ref[g1]

        # Static, fully-unrolled level loop (num_levels <= LPAD, asserted in wrapper).
        for l in range(num_levels):
            # inp[b, dst] = sum_src h[b, src] * wt[src, dst]    (MXU)
            inp0 = jnp.dot(h0, w0, preferred_element_type=jnp.float32)
            inp1 = jnp.dot(h1, w1, preferred_element_type=jnp.float32)
            # NEAT sigmoid 1/(1+exp(-4.9x)) == 0.5*(1+tanh(2.45x)): single EUP op.
            act0 = 0.5 * (1.0 + jnp.tanh(2.45 * inp0))
            act1 = 0.5 * (1.0 + jnp.tanh(2.45 * inp1))
            m0 = mk0[l:l + 1, :]                 # (1, NPAD) static slice, broadcasts over B
            m1 = mk1[l:l + 1, :]
            h0 = h0 + m0 * (act0 - h0)           # blend: update only this level's dst nodes
            h1 = h1 + m1 * (act1 - h1)

        o_ref[g0] = h0
        o_ref[g1] = h1


def neat_forward_pallas(h0, wt, mask, num_levels, *, genome_block=GENOME_BLOCK):
    G, B, _ = h0.shape
    assert 1 <= num_levels <= LPAD, "num_levels must fit the padded level axis (LPAD)"
    assert h0.shape == (G, B, NPAD)
    assert wt.shape == (G, NPAD, NPAD)
    assert mask.shape == (G, LPAD, NPAD)
    assert genome_block % 2 == 0, "genome_block must be even (pairwise interleave)"
    assert G % genome_block == 0, "G must be a multiple of genome_block"
    # (keep G // genome_block >= 2 and even so both v7x TensorCores get work)

    grid = (G // genome_block,)
    return pl.pallas_call(
        partial(_neat_kernel, num_levels=num_levels, genome_block=genome_block),
        out_shape=jax.ShapeDtypeStruct((G, B, NPAD), jnp.float32),
        grid_spec=pltpu.PrefetchScalarGridSpec(
            num_scalar_prefetch=0,
            grid=grid,
            in_specs=[
                pl.BlockSpec((genome_block, B, NPAD), lambda g: (g, 0, 0)),
                pl.BlockSpec((genome_block, NPAD, NPAD), lambda g: (g, 0, 0)),
                pl.BlockSpec((genome_block, LPAD, NPAD), lambda g: (g, 0, 0)),
            ],
            out_specs=pl.BlockSpec((genome_block, B, NPAD), lambda g: (g, 0, 0)),
        ),
        # ~4.2 MiB double-buffered working set: fits every generation's default
        # scoped-VMEM limit (v5e 16 MiB, v6e/v7x 32 MiB) — no vmem override needed.
        compiler_params=pltpu.CompilerParams(
            dimension_semantics=("parallel",)),   # shard genome blocks across TCs on v7x
    )(h0, wt, mask)


# ---------------- pure-python reference (mirrors NeuralNetwork.forward) -------
def ref_forward(x_dict, connections_per_level, dst_level_nodes, sorted_levels):
    node_repr = dict(x_dict)
    for n in dst_level_nodes:
        node_repr[n] = 0.0
    for level in sorted_levels:
        for node in connections_per_level[level]:
            s = 0.0
            for src, w in connections_per_level[level][node].items():
                if src not in node_repr:
                    continue
                s += w * node_repr[src]
            node_repr[node] = 1.0 / (1.0 + np.exp(-4.9 * s))
    return np.array([node_repr[n] for n in sorted(dst_level_nodes)], dtype=np.float32)


if __name__ == "__main__":
    # --- deterministic synthetic NEAT genotypes (no torch, no checkpoints) ----
    # node id -> level:  3 inputs (lvl 0), 2 hidden (lvl 1), 2 outputs (lvl 2)
    node_levels = {0: 0, 1: 0, 2: 0, 3: 1, 4: 1, 5: 2, 6: 2}
    edges = [(0, 3), (1, 3), (2, 3),
             (0, 4), (2, 4),
             (3, 5), (4, 5), (1, 5),   # skip connection 1->5
             (3, 6), (4, 6), (0, 6)]   # skip connection 0->6
    G = 64                             # genomes evaluated in one pallas_call

    key = jax.random.PRNGKey(0)
    wkey, xkey = jax.random.split(key)
    all_w = np.asarray(jax.random.normal(wkey, (G, len(edges)), dtype=jnp.float32))

    input_nodes = sorted(n for n, l in node_levels.items() if l == 0)
    max_level = max(node_levels.values())
    dst_level_nodes = sorted(n for n, l in node_levels.items() if l == max_level)

    # --- batched input dicts: B input vectors per genome -----------------------
    all_x = np.asarray(jax.random.normal(xkey, (G, BATCH, len(input_nodes)),
                                         dtype=jnp.float32))

    # --- pack graphs into dense operands (host-side glue) ----------------------
    assert max(node_levels) < NPAD, "node ids must fit the padded node axis"
    wt = np.zeros((G, NPAD, NPAD), dtype=np.float32)      # wt[g, src, dst]
    mask = np.zeros((G, LPAD, NPAD), dtype=np.float32)
    h0 = np.zeros((G, BATCH, NPAD), dtype=np.float32)     # non-input nodes init 0
    cpls = []                                             # per-genome dicts for the reference
    sorted_levels = None
    for g in range(G):
        cpl = {}
        for (src, dst), w in zip(edges, all_w[g]):
            # guard: dense per-level formulation requires strictly feed-forward levels
            assert node_levels[src] < node_levels[dst], "intra/backward-level edge unsupported"
            cpl.setdefault(node_levels[dst], {}).setdefault(dst, {})[src] = float(w)
        sorted_levels = sorted(cpl.keys())
        assert len(sorted_levels) <= LPAD, "too many levels for LPAD"
        for li, lvl in enumerate(sorted_levels):
            for dst, srcs in cpl[lvl].items():
                mask[g, li, dst] = 1.0
                for src, w in srcs.items():
                    wt[g, src, dst] = w
        cpls.append(cpl)
    h0[:, :, input_nodes] = all_x                         # input-node columns get x

    num_levels = len(sorted_levels)

    # --- run kernel (one call for all genomes x batched inputs) ----------------
    out = neat_forward_pallas(jnp.asarray(h0), jnp.asarray(wt), jnp.asarray(mask),
                              num_levels, genome_block=GENOME_BLOCK)
    out = np.asarray(jax.block_until_ready(out))

    # --- check against the reference semantics ---------------------------------
    for g in range(G):
        for b in range(BATCH):
            x_dict = {n: float(all_x[g, b, i]) for i, n in enumerate(input_nodes)}
            want = ref_forward(x_dict, cpls[g], dst_level_nodes, sorted_levels)
            got = out[g, b, dst_level_nodes]
            np.testing.assert_allclose(got, want, rtol=1e-5, atol=1e-5)

    print("KERNEL_OK")
</pallas_src>

<mosaic_0001>
module attributes {stable_mosaic.version = 11 : i64} {
  func.func @_neat_kernel(%arg0: i32, %arg1: memref<16x64x128xf32, #tpu.memory_space<vmem>>, %arg2: memref<16x128x128xf32, #tpu.memory_space<vmem>>, %arg3: memref<16x8x128xf32, #tpu.memory_space<vmem>>, %arg4: memref<16x64x128xf32, #tpu.memory_space<vmem>>) attributes {dimension_semantics = [#tpu.dimension_semantics<parallel>], iteration_bounds = array<i64: 4>, scalar_prefetch = 0 : i64, scratch_operands = 0 : i64, tpu.core_type = #tpu.core_type<tc>, window_params = [{transform_indices = @transform_0, window_bounds = array<i64: 16, 64, 128>}, {transform_indices = @transform_1, window_bounds = array<i64: 16, 128, 128>}, {transform_indices = @transform_2, window_bounds = array<i64: 16, 8, 128>}, {transform_indices = @transform_3, window_bounds = array<i64: 16, 64, 128>}]} {
    %c0_i32 = arith.constant 0 : i32
    %c8_i32 = arith.constant 8 : i32
    %0 = arith.addi %c0_i32, %c8_i32 : i32
    %c1_i32 = arith.constant 1 : i32
    scf.for %arg5 = %c0_i32 to %0 step %c1_i32  : i32 {
      %c1_i32_1 = arith.constant 1 : i32
      %1 = arith.muli %arg5, %c1_i32_1 : i32
      %c0_i32_2 = arith.constant 0 : i32
      %2 = arith.addi %c0_i32_2, %1 : i32
      %c2_i32 = arith.constant 2 : i32
      %3 = arith.muli %c2_i32, %2 : i32
      %c1_i32_3 = arith.constant 1 : i32
      %4 = arith.addi %3, %c1_i32_3 : i32
      %5 = arith.index_cast %3 : i32 to index
      %c0 = arith.constant 0 : index
      %c0_4 = arith.constant 0 : index
      %6 = vector.load %arg1[%5, %c0, %c0_4] : memref<16x64x128xf32, #tpu.memory_space<vmem>>, vector<1x64x128xf32>
      %7 = vector.shape_cast %6 : vector<1x64x128xf32> to vector<64x128xf32>
      %8 = arith.index_cast %4 : i32 to index
      %c0_5 = arith.constant 0 : index
      %c0_6 = arith.constant 0 : index
      %9 = vector.load %arg1[%8, %c0_5, %c0_6] : memref<16x64x128xf32, #tpu.memory_space<vmem>>, vector<1x64x128xf32>
      %10 = vector.shape_cast %9 : vector<1x64x128xf32> to vector<64x128xf32>
      %11 = arith.index_cast %3 : i32 to index
      %c0_7 = arith.constant 0 : index
      %c0_8 = arith.constant 0 : index
      %12 = vector.load %arg2[%11, %c0_7, %c0_8] : memref<16x128x128xf32, #tpu.memory_space<vmem>>, vector<1x128x128xf32>
      %13 = vector.shape_cast %12 : vector<1x128x128xf32> to vector<128x128xf32>
      %14 = arith.index_cast %4 : i32 to index
      %c0_9 = arith.constant 0 : index
      %c0_10 = arith.constant 0 : index
      %15 = vector.load %arg2[%14, %c0_9, %c0_10] : memref<16x128x128xf32, #tpu.memory_space<vmem>>, vector<1x128x128xf32>
      %16 = vector.shape_cast %15 : vector<1x128x128xf32> to vector<128x128xf32>
      %17 = arith.index_cast %3 : i32 to index
      %c0_11 = arith.constant 0 : index
      %c0_12 = arith.constant 0 : index
      %18 = vector.load %arg3[%17, %c0_11, %c0_12] : memref<16x8x128xf32, #tpu.memory_space<vmem>>, vector<1x8x128xf32>
      %19 = vector.shape_cast %18 : vector<1x8x128xf32> to vector<8x128xf32>
      %20 = arith.index_cast %4 : i32 to index
      %c0_13 = arith.constant 0 : index
      %c0_14 = arith.constant 0 : index
      %21 = vector.load %arg3[%20, %c0_13, %c0_14] : memref<16x8x128xf32, #tpu.memory_space<vmem>>, vector<1x8x128xf32>
      %22 = vector.shape_cast %21 : vector<1x8x128xf32> to vector<8x128xf32>
      %cst = arith.constant dense<0.000000e+00> : vector<64x128xf32>
      %23 = tpu.matmul %7, %13, %cst {dimension_numbers = #tpu.dot_dimension_numbers<[1], [0], [0], [1], [0, 0, 1, 1], [], []>} : vector<64x128xf32>, vector<128x128xf32>, vector<64x128xf32> -> vector<64x128xf32>
      %cst_15 = arith.constant dense<0.000000e+00> : vector<64x128xf32>
      %24 = tpu.matmul %10, %16, %cst_15 {dimension_numbers = #tpu.dot_dimension_numbers<[1], [0], [0], [1], [0, 0, 1, 1], [], []>} : vector<64x128xf32>, vector<128x128xf32>, vector<64x128xf32> -> vector<64x128xf32>
      %cst_16 = arith.constant 2.450000e+00 : f32
      %25 = vector.broadcast %cst_16 : f32 to vector<64x128xf32>
      %26 = arith.mulf %25, %23 : vector<64x128xf32>
      %27 = math.tanh %26 : vector<64x128xf32>
      %cst_17 = arith.constant 1.000000e+00 : f32
      %28 = vector.broadcast %cst_17 : f32 to vector<64x128xf32>
      %29 = arith.addf %28, %27 : vector<64x128xf32>
      %cst_18 = arith.constant 5.000000e-01 : f32
      %30 = vector.broadcast %cst_18 : f32 to vector<64x128xf32>
      %31 = arith.mulf %30, %29 : vector<64x128xf32>
      %cst_19 = arith.constant 2.450000e+00 : f32
      %32 = vector.broadcast %cst_19 : f32 to vector<64x128xf32>
      %33 = arith.mulf %32, %24 : vector<64x128xf32>
      %34 = math.tanh %33 : vector<64x128xf32>
      %cst_20 = arith.constant 1.000000e+00 : f32
      %35 = vector.broadcast %cst_20 : f32 to vector<64x128xf32>
      %36 = arith.addf %35, %34 : vector<64x128xf32>
      %cst_21 = arith.constant 5.000000e-01 : f32
      %37 = vector.broadcast %cst_21 : f32 to vector<64x128xf32>
      %38 = arith.mulf %37, %36 : vector<64x128xf32>
      %39 = vector.extract_strided_slice %19 {offsets = [0, 0], sizes = [1, 128], strides = [1, 1]} : vector<8x128xf32> to vector<1x128xf32>
      %40 = vector.extract_strided_slice %22 {offsets = [0, 0], sizes = [1, 128], strides = [1, 1]} : vector<8x128xf32> to vector<1x128xf32>
      %41 = arith.subf %31, %7 : vector<64x128xf32>
      %42 = vector.broadcast %39 : vector<1x128xf32> to vector<64x128xf32>
      %43 = arith.mulf %42, %41 : vector<64x128xf32>
      %44 = arith.addf %7, %43 : vector<64x128xf32>
      %45 = arith.subf %38, %10 : vector<64x128xf32>
      %46 = vector.broadcast %40 : vector<1x128xf32> to vector<64x128xf32>
      %47 = arith.mulf %46, %45 : vector<64x128xf32>
      %48 = arith.addf %10, %47 : vector<64x128xf32>
      %cst_22 = arith.constant dense<0.000000e+00> : vector<64x128xf32>
      %49 = tpu.matmul %44, %13, %cst_22 {dimension_numbers = #tpu.dot_dimension_numbers<[1], [0], [0], [1], [0, 0, 1, 1], [], []>} : vector<64x128xf32>, vector<128x128xf32>, vector<64x128xf32> -> vector<64x128xf32>
      %cst_23 = arith.constant dense<0.000000e+00> : vector<64x128xf32>
      %50 = tpu.matmul %48, %16, %cst_23 {dimension_numbers = #tpu.dot_dimension_numbers<[1], [0], [0], [1], [0, 0, 1, 1], [], []>} : vector<64x128xf32>, vector<128x128xf32>, vector<64x128xf32> -> vector<64x128xf32>
      %cst_24 = arith.constant 2.450000e+00 : f32
      %51 = vector.broadcast %cst_24 : f32 to vector<64x128xf32>
      %52 = arith.mulf %51, %49 : vector<64x128xf32>
      %53 = math.tanh %52 : vector<64x128xf32>
      %cst_25 = arith.constant 1.000000e+00 : f32
      %54 = vector.broadcast %cst_25 : f32 to vector<64x128xf32>
      %55 = arith.addf %54, %53 : vector<64x128xf32>
      %cst_26 = arith.constant 5.000000e-01 : f32
      %56 = vector.broadcast %cst_26 : f32 to vector<64x128xf32>
      %57 = arith.mulf %56, %55 : vector<64x128xf32>
      %cst_27 = arith.constant 2.450000e+00 : f32
      %58 = vector.broadcast %cst_27 : f32 to vector<64x128xf32>
      %59 = arith.mulf %58, %50 : vector<64x128xf32>
      %60 = math.tanh %59 : vector<64x128xf32>
      %cst_28 = arith.constant 1.000000e+00 : f32
      %61 = vector.broadcast %cst_28 : f32 to vector<64x128xf32>
      %62 = arith.addf %61, %60 : vector<64x128xf32>
      %cst_29 = arith.constant 5.000000e-01 : f32
      %63 = vector.broadcast %cst_29 : f32 to vector<64x128xf32>
      %64 = arith.mulf %63, %62 : vector<64x128xf32>
      %65 = vector.extract_strided_slice %19 {offsets = [1, 0], sizes = [1, 128], strides = [1, 1]} : vector<8x128xf32> to vector<1x128xf32>
      %66 = vector.extract_strided_slice %22 {offsets = [1, 0], sizes = [1, 128], strides = [1, 1]} : vector<8x128xf32> to vector<1x128xf32>
      %67 = arith.subf %57, %44 : vector<64x128xf32>
      %68 = vector.broadcast %65 : vector<1x128xf32> to vector<64x128xf32>
      %69 = arith.mulf %68, %67 : vector<64x128xf32>
      %70 = arith.addf %44, %69 : vector<64x128xf32>
      %71 = arith.subf %64, %48 : vector<64x128xf32>
      %72 = vector.broadcast %66 : vector<1x128xf32> to vector<64x128xf32>
      %73 = arith.mulf %72, %71 : vector<64x128xf32>
      %74 = arith.addf %48, %73 : vector<64x128xf32>
      %75 = arith.index_cast %3 : i32 to index
      %c0_30 = arith.constant 0 : index
      %c0_31 = arith.constant 0 : index
      %76 = vector.load %arg4[%75, %c0_30, %c0_31] : memref<16x64x128xf32, #tpu.memory_space<vmem>>, vector<1x64x128xf32>
      %77 = vector.shape_cast %76 : vector<1x64x128xf32> to vector<64x128xf32>
      %78 = vector.shape_cast %70 : vector<64x128xf32> to vector<1x64x128xf32>
      tpu.vector_store %arg4[%75, %c0_30, %c0_31], %78 {strides = array<i32>} : memref<16x64x128xf32, #tpu.memory_space<vmem>>, vector<1x64x128xf32>,
      %79 = arith.index_cast %4 : i32 to index
      %c0_32 = arith.constant 0 : index
      %c0_33 = arith.constant 0 : index
      %80 = vector.load %arg4[%79, %c0_32, %c0_33] : memref<16x64x128xf32, #tpu.memory_space<vmem>>, vector<1x64x128xf32>
      %81 = vector.shape_cast %80 : vector<1x64x128xf32> to vector<64x128xf32>
      %82 = vector.shape_cast %74 : vector<64x128xf32> to vector<1x64x128xf32>
      tpu.vector_store %arg4[%79, %c0_32, %c0_33], %82 {strides = array<i32>} : memref<16x64x128xf32, #tpu.memory_space<vmem>>, vector<1x64x128xf32>,
    }
    %c8_i32_0 = arith.constant 8 : i32
    return
  }
  func.func @transform_0(%arg0: i32) -> (i32, i32, i32) {
    %c0_i32 = arith.constant 0 : i32
    %c0_i32_0 = arith.constant 0 : i32
    %c0_i32_1 = arith.constant 0 : i32
    return %arg0, %c0_i32, %c0_i32_0 : i32, i32, i32
  }
  func.func @transform_1(%arg0: i32) -> (i32, i32, i32) {
    %c0_i32 = arith.constant 0 : i32
    %c0_i32_0 = arith.constant 0 : i32
    %c0_i32_1 = arith.constant 0 : i32
    return %arg0, %c0_i32, %c0_i32_0 : i32, i32, i32
  }
  func.func @transform_2(%arg0: i32) -> (i32, i32, i32) {
    %c0_i32 = arith.constant 0 : i32
    %c0_i32_0 = arith.constant 0 : i32
    %c0_i32_1 = arith.constant 0 : i32
    return %arg0, %c0_i32, %c0_i32_0 : i32, i32, i32
  }
  func.func @transform_3(%arg0: i32) -> (i32, i32, i32) {
    %c0_i32 = arith.constant 0 : i32
    %c0_i32_0 = arith.constant 0 : i32
    %c0_i32_1 = arith.constant 0 : i32
    return %arg0, %c0_i32, %c0_i32_0 : i32, i32, i32
  }
}

</mosaic_0001>

<llo_original>
// kernel: tpu_custom_call.1
$region0: #{tpu_custom_call.1}
  #allocation0 [shape = 'u32[]', space=smem, size = 0x4, offset = 0x4, fixed_abs, tag = 'smem constant byte address 0x4 - core index']
  #allocation1 [shape = 'u32[72,128]{1,0:T(1,128)}', space=vmem, size = 0x9000, scoped, tag = 'internal scratch']
  %s0 = inlined_call_operand.hbm [shape: f32[64,64,128], index: 0, kind: input, shape index: {}]
  %s1 = inlined_call_operand.hbm [shape: f32[64,128,128], index: 1, kind: input, shape index: {}]
  %s2 = inlined_call_operand.hbm [shape: f32[64,8,128], index: 2, kind: input, shape index: {}]
  %s3 = inlined_call_operand.hbm [shape: f32[64,64,128], index: 3, kind: output, shape index: {}]
  %s4 = sld [smem:[#allocation0]]
  $region64: #{tpu_custom_call.1} parent=0
    _
  %s6 = ssub.s32 1, %s4
  %s7 = scalar_select 0, %s6, %s4
  $region1: #{tpu_custom_call.1} parent=0
    #allocation2 [shape = 'u8[1048576]{0}', space=vmem, size = 0x100000, scoped, tag = 'input window, operand 0']
    #allocation3 [shape = 's32[2]{0}', space=sflag, size = 0x8, scoped, tag = 'scoped memory for tpu_custom_call.1']
    #allocation4 [shape = 's32[2]{0}', space=sflag, size = 0x8, scoped, tag = 'scoped memory for tpu_custom_call.1']
    #allocation5 [shape = 'u8[2097152]{0}', space=vmem, size = 0x200000, scoped, tag = 'input window, operand 1']
    #allocation6 [shape = 's32[2]{0}', space=sflag, size = 0x8, scoped, tag = 'scoped memory for tpu_custom_call.1']
    #allocation7 [shape = 'u8[131072]{0}', space=vmem, size = 0x20000, scoped, tag = 'input window, operand 2']
    #allocation8 [shape = 'u8[1048576]{0}', space=vmem, size = 0x100000, scoped, tag = 'output window, operand 0']
    %8 = vsyncpa [#allocation3], 0
    %s9 = scalar_lea.sflag [#allocation3], 1
    %10 = vsyncpa %s9, 0
    %11 = vsyncpa [#allocation6], 0
    %s12 = scalar_lea.sflag [#allocation6], 1
    %13 = vsyncpa %s12, 0
    %14 = vsyncpa [#allocation4], 0
    %s15 = scalar_lea.sflag [#allocation4], 1
    %16 = vsyncpa %s15, 0
    loop: start=0, step=1, limit=6
    $region2: #{tpu_custom_call.1} parent=1 // loop_pre_header
      _
    $region3: #{tpu_custom_call.1} parent=1 // loop_header
      %s18 = sphi 0, %s22
      %p19 = scmp.ge.s32.totalorder %s18, 6
      %s28 = sphi 0, %s30
      %s31 = sphi 0, %s28
      %s32 = sphi 0, %s31
      %s48 = sphi 0, %s32
      %s54 = sphi 0, %s56
      %s57 = sphi 0, %s54
      %s58 = sphi 0, %s57
      %s74 = sphi 0, %s58
      %s80 = sphi 0, %s82
      %s83 = sphi 0, %s80
      %s84 = sphi 0, %s83
      %s100 = sphi 0, %s84
      %s106 = sphi 0, %s108
      %s109 = sphi 0, %s106
      %s110 = sphi 0, %s109
      %s126 = sphi 0, %s110
    $region4: #{tpu_custom_call.1} parent=1 // loop_header_branch
      %21 = sbr.rel (%p19) target = $region8
    $region5: #{tpu_custom_call.1} parent=1 // loop_body
      %s23 = ssub.s32 %s18, 1
      %s24 = ssub.s32 %s18, 2
      %s25 = sadd.s32 %s18, 1
      %s26 = ssub.s32 %s18, %s25
      %p27 = scmp.eq.s32.totalorder %s26, 0
      %s29 = sadd.s32 %s28, 1
      %s30 = scalar_select %p27, %s28, %s29
      %p33 = pneg %p27
      %p34 = scmp.eq.s32.totalorder %s18, 3
      %p35 = por %p33, %p34
      %p36 = scmp.ne.s32.totalorder %s28, %s31
      %p37 = scmp.eq.s32.totalorder %s18, 0
      %p38 = por %p36, %p37
      %p39 = scmp.ne.s32.totalorder %s28, %s31
      %p40 = scmp.eq.s32.totalorder %s23, 3
      %p41 = por %p39, %p40
      %p42 = scmp.ne.s32.totalorder %s31, %s32
      %p43 = scmp.eq.s32.totalorder %s23, 0
      %p44 = por %p42, %p43
      %p45 = scmp.ne.s32.totalorder %s31, %s32
      %p46 = scmp.eq.s32.totalorder %s24, 3
      %p47 = por %p45, %p46
      %p49 = scmp.ne.s32.totalorder %s32, %s48
      %p50 = scmp.eq.s32.totalorder %s24, 0
      %p51 = por %p49, %p50
      %s52 = ssub.s32 %s18, %s25
      %p53 = scmp.eq.s32.totalorder %s52, 0
      %s55 = sadd.s32 %s54, 1
      %s56 = scalar_select %p53, %s54, %s55
      %p59 = pneg %p53
      %p60 = scmp.eq.s32.totalorder %s18, 3
      %p61 = por %p59, %p60
      %p62 = scmp.ne.s32.totalorder %s54, %s57
      %p63 = scmp.eq.s32.totalorder %s18, 0
      %p64 = por %p62, %p63
      %p65 = scmp.ne.s32.totalorder %s54, %s57
      %p66 = scmp.eq.s32.totalorder %s23, 3
      %p67 = por %p65, %p66
      %p68 = scmp.ne.s32.totalorder %s57, %s58
      %p69 = scmp.eq.s32.totalorder %s23, 0
      %p70 = por %p68, %p69
      %p71 = scmp.ne.s32.totalorder %s57, %s58
      %p72 = scmp.eq.s32.totalorder %s24, 3
      %p73 = por %p71, %p72
      %p75 = scmp.ne.s32.totalorder %s58, %s74
      %p76 = scmp.eq.s32.totalorder %s24, 0
      %p77 = por %p75, %p76
      %s78 = ssub.s32 %s18, %s25
      %p79 = scmp.eq.s32.totalorder %s78, 0
      %s81 = sadd.s32 %s80, 1
      %s82 = scalar_select %p79, %s80, %s81
      %p85 = pneg %p79
      %p86 = scmp.eq.s32.totalorder %s18, 3
      %p87 = por %p85, %p86
      %p88 = scmp.ne.s32.totalorder %s80, %s83
      %p89 = scmp.eq.s32.totalorder %s18, 0
      %p90 = por %p88, %p89
      %p91 = scmp.ne.s32.totalorder %s80, %s83
      %p92 = scmp.eq.s32.totalorder %s23, 3
      %p93 = por %p91, %p92
      %p94 = scmp.ne.s32.totalorder %s83, %s84
      %p95 = scmp.eq.s32.totalorder %s23, 0
      %p96 = por %p94, %p95
      %p97 = scmp.ne.s32.totalorder %s83, %s84
      %p98 = scmp.eq.s32.totalorder %s24, 3
      %p99 = por %p97, %p98
      %p101 = scmp.ne.s32.totalorder %s84, %s100
      %p102 = scmp.eq.s32.totalorder %s24, 0
      %p103 = por %p101, %p102
      %s104 = ssub.s32 %s18, %s25
      %p105 = scmp.eq.s32.totalorder %s104, 0
      %s107 = sadd.s32 %s106, 1
      %s108 = scalar_select %p105, %s106, %s107
      %p111 = pneg %p105
      %p112 = scmp.eq.s32.totalorder %s18, 3
      %p113 = por %p111, %p112
      %p114 = scmp.ne.s32.totalorder %s106, %s109
      %p115 = scmp.eq.s32.totalorder %s18, 0
      %p116 = por %p114, %p115
      %p117 = scmp.ne.s32.totalorder %s106, %s109
      %p118 = scmp.eq.s32.totalorder %s23, 3
      %p119 = por %p117, %p118
      %p120 = scmp.ne.s32.totalorder %s109, %s110
      %p121 = scmp.eq.s32.totalorder %s23, 0
      %p122 = por %p120, %p121
      %p123 = scmp.ne.s32.totalorder %s109, %s110
      %p124 = scmp.eq.s32.totalorder %s24, 3
      %p125 = por %p123, %p124
      %p127 = scmp.ne.s32.totalorder %s110, %s126
      %p128 = scmp.eq.s32.totalorder %s24, 0
      %p129 = por %p127, %p128
      %p130 = scmp.le.s32.totalorder 1, %s18
      %p131 = scmp.lt.s32.totalorder %s18, 5
      %p132 = pnand %p130, %p131
      %p133 = pneg %p132
      // Predicated region
      $region9: #{tpu_custom_call.1} parent=5 // pred_check
        _
      $region10: #{tpu_custom_call.1} parent=5 // pred_check_branch
        %135 = sbr.rel (%p132) target = $region12
      $region11: #{tpu_custom_call.1} parent=5 // pred_region
        %s136 = ssub.s32 %s18, 1
      $region12: #{tpu_custom_call.1} parent=5 // pred_fallthru
        _
      %p137 = scmp.lt.s32.totalorder %s18, 4
      // Predicated region
      $region13: #{tpu_custom_call.1} parent=5 // pred_check
        %p138 = pneg %p137
      $region14: #{tpu_custom_call.1} parent=5 // pred_check_branch
        %140 = sbr.rel (%p138) target = $region16
      $region15: #{tpu_custom_call.1} parent=5 // pred_region
        // Predicated region
        $region17: #{tpu_custom_call.1} parent=15 // pred_check
          %p141 = pneg %p38
        $region18: #{tpu_custom_call.1} parent=15 // pred_check_branch
          %143 = sbr.rel (%p141) target = $region20
        $region19: #{tpu_custom_call.1} parent=15 // pred_region
          %s144 = sand.u32 %s28, 1
          %s145 = scalar_lea.sflag [#allocation3], %s144
          %s146 = sand.u32 %s28, 1
          %s147 = smul.addr %s146, 1024
          %s148 = scalar_lea.vmem [#allocation2], %s147
          %s149 = smul.u32 16, %s18
          %151 = vsyncadd %s145, 0
          %s152 = smul.addr %s149, 8
          %s153 = smul.addr %s152, 8
          %s154 = scalar_lea.hbm %s0, %s153
          %s155 = sshll.u32 %s154, 4
          %s156 = int_to_ptr.hbm [resolvable:$true] %s155
          %s157 = sshll.u32 %s148, 4
          %s158 = int_to_ptr.vmem [resolvable:$true] %s157
          %163 = dma.hbm_to_vmem [thread:$0]  %s156, 16384, %s158, %s145, 128, 128, 8
        $region20: #{tpu_custom_call.1} parent=15 // pred_fallthru
          _
        // Predicated region
        $region21: #{tpu_custom_call.1} parent=15 // pred_check
          %p164 = pneg %p64
        $region22: #{tpu_custom_call.1} parent=15 // pred_check_branch
          %166 = sbr.rel (%p164) target = $region24
        $region23: #{tpu_custom_call.1} parent=15 // pred_region
          %s167 = sand.u32 %s18, 1
          %s168 = scalar_lea.sflag [#allocation6], %s167
          %s169 = sand.u32 %s54, 1
          %s170 = smul.addr %s169, 2048
          %s171 = scalar_lea.vmem [#allocation5], %s170
          %s172 = smul.u32 16, %s18
          %174 = vsyncadd %s168, 0
          %s175 = smul.addr %s172, 16
          %s176 = smul.addr %s175, 8
          %s177 = scalar_lea.hbm %s1, %s176
          %s178 = sshll.u32 %s177, 4
          %s179 = int_to_ptr.hbm [resolvable:$true] %s178
          %s180 = sshll.u32 %s171, 4
          %s181 = int_to_ptr.vmem [resolvable:$true] %s180
          %186 = dma.hbm_to_vmem [thread:$0]  %s179, 32768, %s181, %s168, 128, 128, 8
        $region24: #{tpu_custom_call.1} parent=15 // pred_fallthru
          _
        // Predicated region
        $region25: #{tpu_custom_call.1} parent=15 // pred_check
          %p187 = pneg %p90
        $region26: #{tpu_custom_call.1} parent=15 // pred_check_branch
          %189 = sbr.rel (%p187) target = $region28
        $region27: #{tpu_custom_call.1} parent=15 // pred_region
          %s190 = sand.u32 %s18, 1
          %s191 = scalar_lea.sflag [#allocation6], %s190
          %s192 = sand.u32 %s80, 1
          %s193 = smul.addr %s192, 128
          %s194 = scalar_lea.vmem [#allocation7], %s193
          %s195 = smul.u32 16, %s18
          %197 = vsyncadd %s191, 0
          %s198 = smul.addr %s195, 8
          %s199 = scalar_lea.hbm %s2, %s198
          %s200 = sshll.u32 %s199, 4
          %s201 = int_to_ptr.hbm [resolvable:$true] %s200
          %s202 = sshll.u32 %s194, 4
          %s203 = int_to_ptr.vmem [resolvable:$true] %s202
          %208 = dma.hbm_to_vmem [thread:$0]  %s201, 2048, %s203, %s191, 128, 128, 8
        $region28: #{tpu_custom_call.1} parent=15 // pred_fallthru
          _
      $region16: #{tpu_custom_call.1} parent=5 // pred_fallthru
        _
      %p209 = scmp.le.s32.totalorder 1, %s18
      %p210 = scmp.lt.s32.totalorder %s18, 5
      %p211 = pnand %p209, %p210
      %p212 = pneg %p211
      // Predicated region
      $region29: #{tpu_custom_call.1} parent=5 // pred_check
        _
      $region30: #{tpu_custom_call.1} parent=5 // pred_check_branch
        %214 = sbr.rel (%p211) target = $region32
      $region31: #{tpu_custom_call.1} parent=5 // pred_region
        %s215 = ssub.s32 %s18, 1
        %s216 = sand.u32 %s31, 1
        %s217 = scalar_lea.sflag [#allocation3], %s216
        %s218 = sand.u32 %s31, 1
        %s219 = smul.addr %s218, 1024
        %s220 = scalar_lea.vmem [#allocation2], %s219
        // Predicated region
        $region33: #{tpu_custom_call.1} parent=31 // pred_check
          %p221 = pneg %p44
        $region34: #{tpu_custom_call.1} parent=31 // pred_check_branch
          %223 = sbr.rel (%p221) target = $region36
        $region35: #{tpu_custom_call.1} parent=31 // pred_region
          %225 = dma.done %s217, 16384
        $region36: #{tpu_custom_call.1} parent=31 // pred_fallthru
          _
        %s226 = sand.u32 %s23, 1
        %s227 = scalar_lea.sflag [#allocation6], %s226
        %s228 = sand.u32 %s57, 1
        %s229 = smul.addr %s228, 2048
        %s230 = scalar_lea.vmem [#allocation5], %s229
        // Predicated region
        $region37: #{tpu_custom_call.1} parent=31 // pred_check
          %p231 = pneg %p70
        $region38: #{tpu_custom_call.1} parent=31 // pred_check_branch
          %233 = sbr.rel (%p231) target = $region40
        $region39: #{tpu_custom_call.1} parent=31 // pred_region
          %235 = dma.done %s227, 32768
        $region40: #{tpu_custom_call.1} parent=31 // pred_fallthru
          _
        %s236 = sand.u32 %s23, 1
        %s237 = scalar_lea.sflag [#allocation6], %s236
        %s238 = sand.u32 %s83, 1
        %s239 = smul.addr %s238, 128
        %s240 = scalar_lea.vmem [#allocation7], %s239
        // Predicated region
        $region41: #{tpu_custom_call.1} parent=31 // pred_check
          %p241 = pneg %p96
        $region42: #{tpu_custom_call.1} parent=31 // pred_check_branch
          %243 = sbr.rel (%p241) target = $region44
        $region43: #{tpu_custom_call.1} parent=31 // pred_region
          %245 = dma.done %s237, 2048
        $region44: #{tpu_custom_call.1} parent=31 // pred_fallthru
          _
        %s246 = sand.u32 %s31, 1
        %s247 = scalar_lea.sflag [#allocation3], %s246
        %s248 = sand.u32 %s31, 1
        %s249 = smul.addr %s248, 1024
        %s250 = scalar_lea.vmem [#allocation2], %s249
        %p251 = pneg %p44
        %p252 = pneg %p41
        %s253 = sand.u32 %s23, 1
        %s254 = scalar_lea.sflag [#allocation6], %s253
        %s255 = sand.u32 %s57, 1
        %s256 = smul.addr %s255, 2048
        %s257 = scalar_lea.vmem [#allocation5], %s256
        %p258 = pneg %p70
        %p259 = pneg %p67
        %s260 = sand.u32 %s23, 1
        %s261 = scalar_lea.sflag [#allocation6], %s260
        %s262 = sand.u32 %s83, 1
        %s263 = smul.addr %s262, 128
        %s264 = scalar_lea.vmem [#allocation7], %s263
        %p265 = pneg %p96
        %p266 = pneg %p93
        %p267 = pneg %p122
        %p268 = pneg %p119
        %s269 = sand.u32 %s109, 1
        %s270 = scalar_lea.sflag [#allocation4], %s269
        %s271 = sand.u32 %s109, 1
        %s272 = smul.addr %s271, 1024
        %s273 = scalar_lea.vmem [#allocation8], %s272
        %s274 = smul.u32 16, %s23
        %s275 = smul.u32 16, %s23
        %s276 = smul.u32 16, %s23
        %s277 = smul.u32 16, %s23
        loop: start=0, step=1, limit=8
        $region45: #{tpu_custom_call.1} parent=31 // loop_pre_header
          _
        $region46: #{tpu_custom_call.1} parent=31 // loop_header
          %s279 = sphi 0, %s283
          %p280 = scmp.ge.s32.totalorder %s279, 8
        $region47: #{tpu_custom_call.1} parent=31 // loop_header_branch
          %282 = sbr.rel (%p280) target = $region51
        $region48: #{tpu_custom_call.1} parent=31 // loop_body
          %s284 = smul.u32 %s279, 2
          %s285 = sadd.s32 %s284, 1
          %s286 = smul.u32 %s284, 64
          %s287 = scalar_lea.vmem %s220, %s286 [#allocation2]
          %v288 = vld [vmem:[%s287] sm:$0xff]
          %v289 = vld [vmem:[%s287 + $0x8] sm:$0xff]
          %v290 = vld [vmem:[%s287 + $0x10] sm:$0xff]
          %v291 = vld [vmem:[%s287 + $0x18] sm:$0xff]
          %v292 = vld [vmem:[%s287 + $0x20] sm:$0xff]
          %v293 = vld [vmem:[%s287 + $0x28] sm:$0xff]
          %v294 = vld [vmem:[%s287 + $0x30] sm:$0xff]
          %v295 = vld [vmem:[%s287 + $0x38] sm:$0xff]
          %s296 = smul.u32 %s285, 64
          %s297 = scalar_lea.vmem %s220, %s296 [#allocation2]
          %v298 = vld [vmem:[%s297] sm:$0xff]
          %v299 = vld [vmem:[%s297 + $0x8] sm:$0xff]
          %v300 = vld [vmem:[%s297 + $0x10] sm:$0xff]
          %v301 = vld [vmem:[%s297 + $0x18] sm:$0xff]
          %v302 = vld [vmem:[%s297 + $0x20] sm:$0xff]
          %v303 = vld [vmem:[%s297 + $0x28] sm:$0xff]
          %v304 = vld [vmem:[%s297 + $0x30] sm:$0xff]
          %v305 = vld [vmem:[%s297 + $0x38] sm:$0xff]
          %s306 = smul.u32 %s284, 128
          %s307 = scalar_lea.vmem %s230, %s306 [#allocation5]
          %v308 = vld [vmem:[%s307] sm:$0xff]
          %v309 = vld [vmem:[%s307 + $0x8] sm:$0xff]
          %v310 = vld [vmem:[%s307 + $0x10] sm:$0xff]
          %v311 = vld [vmem:[%s307 + $0x18] sm:$0xff]
          %v312 = vld [vmem:[%s307 + $0x20] sm:$0xff]
          %v313 = vld [vmem:[%s307 + $0x28] sm:$0xff]
          %v314 = vld [vmem:[%s307 + $0x30] sm:$0xff]
          %v315 = vld [vmem:[%s307 + $0x38] sm:$0xff]
          %v316 = vld [vmem:[%s307 + $0x40] sm:$0xff]
          %v317 = vld [vmem:[%s307 + $0x48] sm:$0xff]
          %v318 = vld [vmem:[%s307 + $0x50] sm:$0xff]
          %v319 = vld [vmem:[%s307 + $0x58] sm:$0xff]
          %v320 = vld [vmem:[%s307 + $0x60] sm:$0xff]
          %v321 = vld [vmem:[%s307 + $0x68] sm:$0xff]
          %v322 = vld [vmem:[%s307 + $0x70] sm:$0xff]
          %v323 = vld [vmem:[%s307 + $0x78] sm:$0xff]
          %s324 = smul.u32 %s285, 128
          %s325 = scalar_lea.vmem %s230, %s324 [#allocation5]
          %v326 = vld [vmem:[%s325] sm:$0xff]
          %v327 = vld [vmem:[%s325 + $0x8] sm:$0xff]
          %v328 = vld [vmem:[%s325 + $0x10] sm:$0xff]
          %v329 = vld [vmem:[%s325 + $0x18] sm:$0xff]
          %v330 = vld [vmem:[%s325 + $0x20] sm:$0xff]
          %v331 = vld [vmem:[%s325 + $0x28] sm:$0xff]
          %v332 = vld [vmem:[%s325 + $0x30] sm:$0xff]
          %v333 = vld [vmem:[%s325 + $0x38] sm:$0xff]
          %v334 = vld [vmem:[%s325 + $0x40] sm:$0xff]
          %v335 = vld [vmem:[%s325 + $0x48] sm:$0xff]
          %v336 = vld [vmem:[%s325 + $0x50] sm:$0xff]
          %v337 = vld [vmem:[%s325 + $0x58] sm:$0xff]
          %v338 = vld [vmem:[%s325 + $0x60] sm:$0xff]
          %v339 = vld [vmem:[%s325 + $0x68] sm:$0xff]
          %v340 = vld [vmem:[%s325 + $0x70] sm:$0xff]
          %v341 = vld [vmem:[%s325 + $0x78] sm:$0xff]
          %s342 = smul.u32 %s284, 8
          %s343 = scalar_lea.vmem %s240, %s342 [#allocation7]
          %v344 = vld [vmem:[%s343] sm:$0xff]
          %s345 = smul.u32 %s285, 8
          %s346 = scalar_lea.vmem %s240, %s345 [#allocation7]
          %v347 = vld [vmem:[%s346] sm:$0xff]
          %348 = vmatpush.msra.mxu0 %v323
          %349 = vmatpush.msra.mxu0 %v322
          %350 = vmatpush.msra.mxu0 %v321
          %351 = vmatpush.msra.mxu0 %v320
          %352 = vmatpush.msra.mxu0 %v319
          %353 = vmatpush.msra.mxu0 %v318
          %354 = vmatpush.msra.mxu0 %v317
          %355 = vmatpush.msra.mxu0 %v316
          %356 = vmatpush.msra.mxu0 %v315
          %357 = vmatpush.msra.mxu0 %v314
          %358 = vmatpush.msra.mxu0 %v313
          %359 = vmatpush.msra.mxu0 %v312
          %360 = vmatpush.msra.mxu0 %v311
          %361 = vmatpush.msra.mxu0 %v310
          %362 = vmatpush.msra.mxu0 %v309
          %363 = vmatpush.msra.mxu0 %v308
          %364 = vmatmul.f32.gmra.mxu0 %v288
          %v365 = vpop.f32.mrf.mxu0
          %v366 = vadd.f32 0.0, %v365
          %367 = vmatmul.f32.gmra.mxu0 %v289
          %v368 = vpop.f32.mrf.mxu0
          %v369 = vadd.f32 0.0, %v368
          %370 = vmatmul.f32.gmra.mxu0 %v290
          %v371 = vpop.f32.mrf.mxu0
          %v372 = vadd.f32 0.0, %v371
          %373 = vmatmul.f32.gmra.mxu0 %v291
          %v374 = vpop.f32.mrf.mxu0
          %v375 = vadd.f32 0.0, %v374
          %376 = vmatmul.f32.gmra.mxu0 %v292
          %v377 = vpop.f32.mrf.mxu0
          %v378 = vadd.f32 0.0, %v377
          %379 = vmatmul.f32.gmra.mxu0 %v293
          %v380 = vpop.f32.mrf.mxu0
          %v381 = vadd.f32 0.0, %v380
          %382 = vmatmul.f32.gmra.mxu0 %v294
          %v383 = vpop.f32.mrf.mxu0
          %v384 = vadd.f32 0.0, %v383
          %385 = vmatmul.f32.gmra.mxu0 %v295
          %v386 = vpop.f32.mrf.mxu0
          %v387 = vadd.f32 0.0, %v386
          %388 = vdwg.mxu0
          %389 = vmatpush.msra.mxu0 %v341
          %390 = vmatpush.msra.mxu0 %v340
          %391 = vmatpush.msra.mxu0 %v339
          %392 = vmatpush.msra.mxu0 %v338
          %393 = vmatpush.msra.mxu0 %v337
          %394 = vmatpush.msra.mxu0 %v336
          %395 = vmatpush.msra.mxu0 %v335
          %396 = vmatpush.msra.mxu0 %v334
          %397 = vmatpush.msra.mxu0 %v333
          %398 = vmatpush.msra.mxu0 %v332
          %399 = vmatpush.msra.mxu0 %v331
          %400 = vmatpush.msra.mxu0 %v330
          %401 = vmatpush.msra.mxu0 %v329
          %402 = vmatpush.msra.mxu0 %v328
          %403 = vmatpush.msra.mxu0 %v327
          %404 = vmatpush.msra.mxu0 %v326
          %405 = vmatmul.f32.gmra.mxu0 %v298
          %v406 = vpop.f32.mrf.mxu0
          %v407 = vadd.f32 0.0, %v406
          %408 = vmatmul.f32.gmra.mxu0 %v299
          %v409 = vpop.f32.mrf.mxu0
          %v410 = vadd.f32 0.0, %v409
          %411 = vmatmul.f32.gmra.mxu0 %v300
          %v412 = vpop.f32.mrf.mxu0
          %v413 = vadd.f32 0.0, %v412
          %414 = vmatmul.f32.gmra.mxu0 %v301
          %v415 = vpop.f32.mrf.mxu0
          %v416 = vadd.f32 0.0, %v415
          %417 = vmatmul.f32.gmra.mxu0 %v302
          %v418 = vpop.f32.mrf.mxu0
          %v419 = vadd.f32 0.0, %v418
          %420 = vmatmul.f32.gmra.mxu0 %v303
          %v421 = vpop.f32.mrf.mxu0
          %v422 = vadd.f32 0.0, %v421
          %423 = vmatmul.f32.gmra.mxu0 %v304
          %v424 = vpop.f32.mrf.mxu0
          %v425 = vadd.f32 0.0, %v424
          %426 = vmatmul.f32.gmra.mxu0 %v305
          %v427 = vpop.f32.mrf.mxu0
          %v428 = vadd.f32 0.0, %v427
          %429 = vdwg.mxu0
          %v430 = vmul.f32 %v366, 2.45
          %v431 = vmul.f32 %v369, 2.45
          %v432 = vmul.f32 %v372, 2.45
          %v433 = vmul.f32 %v375, 2.45
          %v434 = vmul.f32 %v378, 2.45
          %v435 = vmul.f32 %v381, 2.45
          %v436 = vmul.f32 %v384, 2.45
          %v437 = vmul.f32 %v387, 2.45
          %v438 = vtanh.pop %v430
          %v439 = vtanh.pop %v431
          %v440 = vtanh.pop %v432
          %v441 = vtanh.pop %v433
          %v442 = vtanh.pop %v434
          %v443 = vtanh.pop %v435
          %v444 = vtanh.pop %v436
          %v445 = vtanh.pop %v437
          %v446 = vadd.f32 %v438, 1.0
          %v447 = vadd.f32 %v439, 1.0
          %v448 = vadd.f32 %v440, 1.0
          %v449 = vadd.f32 %v441, 1.0
          %v450 = vadd.f32 %v442, 1.0
          %v451 = vadd.f32 %v443, 1.0
          %v452 = vadd.f32 %v444, 1.0
          %v453 = vadd.f32 %v445, 1.0
          %v454 = vmul.f32 %v446, 0.5
          %v455 = vmul.f32 %v447, 0.5
          %v456 = vmul.f32 %v448, 0.5
          %v457 = vmul.f32 %v449, 0.5
          %v458 = vmul.f32 %v450, 0.5
          %v459 = vmul.f32 %v451, 0.5
          %v460 = vmul.f32 %v452, 0.5
          %v461 = vmul.f32 %v453, 0.5
          %v462 = vmul.f32 %v407, 2.45
          %v463 = vmul.f32 %v410, 2.45
          %v464 = vmul.f32 %v413, 2.45
          %v465 = vmul.f32 %v416, 2.45
          %v466 = vmul.f32 %v419, 2.45
          %v467 = vmul.f32 %v422, 2.45
          %v468 = vmul.f32 %v425, 2.45
          %v469 = vmul.f32 %v428, 2.45
          %v470 = vtanh.pop %v462
          %v471 = vtanh.pop %v463
          %v472 = vtanh.pop %v464
          %v473 = vtanh.pop %v465
          %v474 = vtanh.pop %v466
          %v475 = vtanh.pop %v467
          %v476 = vtanh.pop %v468
          %v477 = vtanh.pop %v469
          %v478 = vadd.f32 %v470, 1.0
          %v479 = vadd.f32 %v471, 1.0
          %v480 = vadd.f32 %v472, 1.0
          %v481 = vadd.f32 %v473, 1.0
          %v482 = vadd.f32 %v474, 1.0
          %v483 = vadd.f32 %v475, 1.0
          %v484 = vadd.f32 %v476, 1.0
          %v485 = vadd.f32 %v477, 1.0
          %v486 = vmul.f32 %v478, 0.5
          %v487 = vmul.f32 %v479, 0.5
          %v488 = vmul.f32 %v480, 0.5
          %v489 = vmul.f32 %v481, 0.5
          %v490 = vmul.f32 %v482, 0.5
          %v491 = vmul.f32 %v483, 0.5
          %v492 = vmul.f32 %v484, 0.5
          %v493 = vmul.f32 %v485, 0.5
          %v494 = vsub.f32 %v454, %v288
          %v495 = vsub.f32 %v455, %v289
          %v496 = vsub.f32 %v456, %v290
          %v497 = vsub.f32 %v457, %v291
          %v498 = vsub.f32 %v458, %v292
          %v499 = vsub.f32 %v459, %v293
          %v500 = vsub.f32 %v460, %v294
          %v501 = vsub.f32 %v461, %v295
          %v502 = vperm.slane %v344, 0
          %v503 = vmul.f32 %v502, %v494
          %v504 = vmul.f32 %v502, %v495
          %v505 = vmul.f32 %v502, %v496
          %v506 = vmul.f32 %v502, %v497
          %v507 = vmul.f32 %v502, %v498
          %v508 = vmul.f32 %v502, %v499
          %v509 = vmul.f32 %v502, %v500
          %v510 = vmul.f32 %v502, %v501
          %v511 = vadd.f32 %v288, %v503
          %v512 = vadd.f32 %v289, %v504
          %v513 = vadd.f32 %v290, %v505
          %v514 = vadd.f32 %v291, %v506
          %v515 = vadd.f32 %v292, %v507
          %v516 = vadd.f32 %v293, %v508
          %v517 = vadd.f32 %v294, %v509
          %v518 = vadd.f32 %v295, %v510
          %v519 = vsub.f32 %v486, %v298
          %v520 = vsub.f32 %v487, %v299
          %v521 = vsub.f32 %v488, %v300
          %v522 = vsub.f32 %v489, %v301
          %v523 = vsub.f32 %v490, %v302
          %v524 = vsub.f32 %v491, %v303
          %v525 = vsub.f32 %v492, %v304
          %v526 = vsub.f32 %v493, %v305
          %v527 = vperm.slane %v347, 0
          %v528 = vmul.f32 %v527, %v519
          %v529 = vmul.f32 %v527, %v520
          %v530 = vmul.f32 %v527, %v521
          %v531 = vmul.f32 %v527, %v522
          %v532 = vmul.f32 %v527, %v523
          %v533 = vmul.f32 %v527, %v524
          %v534 = vmul.f32 %v527, %v525
          %v535 = vmul.f32 %v527, %v526
          %v536 = vadd.f32 %v298, %v528
          %v537 = vadd.f32 %v299, %v529
          %v538 = vadd.f32 %v300, %v530
          %v539 = vadd.f32 %v301, %v531
          %v540 = vadd.f32 %v302, %v532
          %v541 = vadd.f32 %v303, %v533
          %v542 = vadd.f32 %v304, %v534
          %v543 = vadd.f32 %v305, %v535
          %544 = vmatpush.msra.mxu0 %v323
          %545 = vmatpush.msra.mxu0 %v322
          %546 = vmatpush.msra.mxu0 %v321
          %547 = vmatpush.msra.mxu0 %v320
          %548 = vmatpush.msra.mxu0 %v319
          %549 = vmatpush.msra.mxu0 %v318
          %550 = vmatpush.msra.mxu0 %v317
          %551 = vmatpush.msra.mxu0 %v316
          %552 = vmatpush.msra.mxu0 %v315
          %553 = vmatpush.msra.mxu0 %v314
          %554 = vmatpush.msra.mxu0 %v313
          %555 = vmatpush.msra.mxu0 %v312
          %556 = vmatpush.msra.mxu0 %v311
          %557 = vmatpush.msra.mxu0 %v310
          %558 = vmatpush.msra.mxu0 %v309
          %559 = vmatpush.msra.mxu0 %v308
          %560 = vmatmul.f32.gmra.mxu0 %v511
          %v561 = vpop.f32.mrf.mxu0
          %v562 = vadd.f32 0.0, %v561
          %563 = vmatmul.f32.gmra.mxu0 %v512
          %v564 = vpop.f32.mrf.mxu0
          %v565 = vadd.f32 0.0, %v564
          %566 = vmatmul.f32.gmra.mxu0 %v513
          %v567 = vpop.f32.mrf.mxu0
          %v568 = vadd.f32 0.0, %v567
          %569 = vmatmul.f32.gmra.mxu0 %v514
          %v570 = vpop.f32.mrf.mxu0
          %v571 = vadd.f32 0.0, %v570
          %572 = vmatmul.f32.gmra.mxu0 %v515
          %v573 = vpop.f32.mrf.mxu0
          %v574 = vadd.f32 0.0, %v573
          %575 = vmatmul.f32.gmra.mxu0 %v516
          %v576 = vpop.f32.mrf.mxu0
          %v577 = vadd.f32 0.0, %v576
          %578 = vmatmul.f32.gmra.mxu0 %v517
          %v579 = vpop.f32.mrf.mxu0
          %v580 = vadd.f32 0.0, %v579
          %581 = vmatmul.f32.gmra.mxu0 %v518
          %v582 = vpop.f32.mrf.mxu0
          %v583 = vadd.f32 0.0, %v582
          %584 = vdwg.mxu0
          %585 = vmatpush.msra.mxu0 %v341
          %586 = vmatpush.msra.mxu0 %v340
          %587 = vmatpush.msra.mxu0 %v339
          %588 = vmatpush.msra.mxu0 %v338
          %589 = vmatpush.msra.mxu0 %v337
          %590 = vmatpush.msra.mxu0 %v336
          %591 = vmatpush.msra.mxu0 %v335
          %592 = vmatpush.msra.mxu0 %v334
          %593 = vmatpush.msra.mxu0 %v333
          %594 = vmatpush.msra.mxu0 %v332
          %595 = vmatpush.msra.mxu0 %v331
          %596 = vmatpush.msra.mxu0 %v330
          %597 = vmatpush.msra.mxu0 %v329
          %598 = vmatpush.msra.mxu0 %v328
          %599 = vmatpush.msra.mxu0 %v327
          %600 = vmatpush.msra.mxu0 %v326
          %601 = vmatmul.f32.gmra.mxu0 %v536
          %v602 = vpop.f32.mrf.mxu0
          %v603 = vadd.f32 0.0, %v602
          %604 = vmatmul.f32.gmra.mxu0 %v537
          %v605 = vpop.f32.mrf.mxu0
          %v606 = vadd.f32 0.0, %v605
          %607 = vmatmul.f32.gmra.mxu0 %v538
          %v608 = vpop.f32.mrf.mxu0
          %v609 = vadd.f32 0.0, %v608
          %610 = vmatmul.f32.gmra.mxu0 %v539
          %v611 = vpop.f32.mrf.mxu0
          %v612 = vadd.f32 0.0, %v611
          %613 = vmatmul.f32.gmra.mxu0 %v540
          %v614 = vpop.f32.mrf.mxu0
          %v615 = vadd.f32 0.0, %v614
          %616 = vmatmul.f32.gmra.mxu0 %v541
          %v617 = vpop.f32.mrf.mxu0
          %v618 = vadd.f32 0.0, %v617
          %619 = vmatmul.f32.gmra.mxu0 %v542
          %v620 = vpop.f32.mrf.mxu0
          %v621 = vadd.f32 0.0, %v620
          %622 = vmatmul.f32.gmra.mxu0 %v543
          %v623 = vpop.f32.mrf.mxu0
          %v624 = vadd.f32 0.0, %v623
          %625 = vdwg.mxu0
          %v626 = vmul.f32 %v562, 2.45
          %v627 = vmul.f32 %v565, 2.45
          %v628 = vmul.f32 %v568, 2.45
          %v629 = vmul.f32 %v571, 2.45
          %v630 = vmul.f32 %v574, 2.45
          %v631 = vmul.f32 %v577, 2.45
          %v632 = vmul.f32 %v580, 2.45
          %v633 = vmul.f32 %v583, 2.45
          %v634 = vtanh.pop %v626
          %v635 = vtanh.pop %v627
          %v636 = vtanh.pop %v628
          %v637 = vtanh.pop %v629
          %v638 = vtanh.pop %v630
          %v639 = vtanh.pop %v631
          %v640 = vtanh.pop %v632
          %v641 = vtanh.pop %v633
          %v642 = vadd.f32 %v634, 1.0
          %v643 = vadd.f32 %v635, 1.0
          %v644 = vadd.f32 %v636, 1.0
          %v645 = vadd.f32 %v637, 1.0
          %v646 = vadd.f32 %v638, 1.0
          %v647 = vadd.f32 %v639, 1.0
          %v648 = vadd.f32 %v640, 1.0
          %v649 = vadd.f32 %v641, 1.0
          %v650 = vmul.f32 %v642, 0.5
          %v651 = vmul.f32 %v643, 0.5
          %v652 = vmul.f32 %v644, 0.5
          %v653 = vmul.f32 %v645, 0.5
          %v654 = vmul.f32 %v646, 0.5
          %v655 = vmul.f32 %v647, 0.5
          %v656 = vmul.f32 %v648, 0.5
          %v657 = vmul.f32 %v649, 0.5
          %v658 = vmul.f32 %v603, 2.45
          %v659 = vmul.f32 %v606, 2.45
          %v660 = vmul.f32 %v609, 2.45
          %v661 = vmul.f32 %v612, 2.45
          %v662 = vmul.f32 %v615, 2.45
          %v663 = vmul.f32 %v618, 2.45
          %v664 = vmul.f32 %v621, 2.45
          %v665 = vmul.f32 %v624, 2.45
          %v666 = vtanh.pop %v658
          %v667 = vtanh.pop %v659
          %v668 = vtanh.pop %v660
          %v669 = vtanh.pop %v661
          %v670 = vtanh.pop %v662
          %v671 = vtanh.pop %v663
          %v672 = vtanh.pop %v664
          %v673 = vtanh.pop %v665
          %v674 = vadd.f32 %v666, 1.0
          %v675 = vadd.f32 %v667, 1.0
          %v676 = vadd.f32 %v668, 1.0
          %v677 = vadd.f32 %v669, 1.0
          %v678 = vadd.f32 %v670, 1.0
          %v679 = vadd.f32 %v671, 1.0
          %v680 = vadd.f32 %v672, 1.0
          %v681 = vadd.f32 %v673, 1.0
          %v682 = vmul.f32 %v674, 0.5
          %v683 = vmul.f32 %v675, 0.5
          %v684 = vmul.f32 %v676, 0.5
          %v685 = vmul.f32 %v677, 0.5
          %v686 = vmul.f32 %v678, 0.5
          %v687 = vmul.f32 %v679, 0.5
          %v688 = vmul.f32 %v680, 0.5
          %v689 = vmul.f32 %v681, 0.5
          %v690 = vsub.f32 %v650, %v511
          %v691 = vsub.f32 %v651, %v512
          %v692 = vsub.f32 %v652, %v513
          %v693 = vsub.f32 %v653, %v514
          %v694 = vsub.f32 %v654, %v515
          %v695 = vsub.f32 %v655, %v516
          %v696 = vsub.f32 %v656, %v517
          %v697 = vsub.f32 %v657, %v518
          %v698 = vperm.slane %v344, 1
          %v699 = vmul.f32 %v698, %v690
          %v700 = vmul.f32 %v698, %v691
          %v701 = vmul.f32 %v698, %v692
          %v702 = vmul.f32 %v698, %v693
          %v703 = vmul.f32 %v698, %v694
          %v704 = vmul.f32 %v698, %v695
          %v705 = vmul.f32 %v698, %v696
          %v706 = vmul.f32 %v698, %v697
          %v707 = vadd.f32 %v511, %v699
          %v708 = vadd.f32 %v512, %v700
          %v709 = vadd.f32 %v513, %v701
          %v710 = vadd.f32 %v514, %v702
          %v711 = vadd.f32 %v515, %v703
          %v712 = vadd.f32 %v516, %v704
          %v713 = vadd.f32 %v517, %v705
          %v714 = vadd.f32 %v518, %v706
          %v715 = vsub.f32 %v682, %v536
          %v716 = vsub.f32 %v683, %v537
          %v717 = vsub.f32 %v684, %v538
          %v718 = vsub.f32 %v685, %v539
          %v719 = vsub.f32 %v686, %v540
          %v720 = vsub.f32 %v687, %v541
          %v721 = vsub.f32 %v688, %v542
          %v722 = vsub.f32 %v689, %v543
          %v723 = vperm.slane %v347, 1
          %v724 = vmul.f32 %v723, %v715
          %v725 = vmul.f32 %v723, %v716
          %v726 = vmul.f32 %v723, %v717
          %v727 = vmul.f32 %v723, %v718
          %v728 = vmul.f32 %v723, %v719
          %v729 = vmul.f32 %v723, %v720
          %v730 = vmul.f32 %v723, %v721
          %v731 = vmul.f32 %v723, %v722
          %v732 = vadd.f32 %v536, %v724
          %v733 = vadd.f32 %v537, %v725
          %v734 = vadd.f32 %v538, %v726
          %v735 = vadd.f32 %v539, %v727
          %v736 = vadd.f32 %v540, %v728
          %v737 = vadd.f32 %v541, %v729
          %v738 = vadd.f32 %v542, %v730
          %v739 = vadd.f32 %v543, %v731
          %s740 = scalar_lea.vmem %s273, %s286 [#allocation8]
          %741 = vst [vmem:[%s740] sm:$0xff] %v707
          %742 = vst [vmem:[%s740 + $0x8] sm:$0xff] %v708
          %743 = vst [vmem:[%s740 + $0x10] sm:$0xff] %v709
          %744 = vst [vmem:[%s740 + $0x18] sm:$0xff] %v710
          %745 = vst [vmem:[%s740 + $0x20] sm:$0xff] %v711
          %746 = vst [vmem:[%s740 + $0x28] sm:$0xff] %v712
          %747 = vst [vmem:[%s740 + $0x30] sm:$0xff] %v713
          %748 = vst [vmem:[%s740 + $0x38] sm:$0xff] %v714
          %s749 = scalar_lea.vmem %s273, %s296 [#allocation8]
          %750 = vst [vmem:[%s749] sm:$0xff] %v732
          %751 = vst [vmem:[%s749 + $0x8] sm:$0xff] %v733
          %752 = vst [vmem:[%s749 + $0x10] sm:$0xff] %v734
          %753 = vst [vmem:[%s749 + $0x18] sm:$0xff] %v735
          %754 = vst [vmem:[%s749 + $0x20] sm:$0xff] %v736
          %755 = vst [vmem:[%s749 + $0x28] sm:$0xff] %v737
          %756 = vst [vmem:[%s749 + $0x30] sm:$0xff] %v738
          %757 = vst [vmem:[%s749 + $0x38] sm:$0xff] %v739
        $region49: #{tpu_custom_call.1} parent=31 // loop_footer
          %s283 = sadd.s32 1, %s279
        $region50: #{tpu_custom_call.1} parent=31 // loop_footer_branch
          %278 = sbr.rel target = $region46
        $region51: #{tpu_custom_call.1} parent=31 // loop_exit
          _
        %s758 = sand.u32 %s109, 1
        %s759 = scalar_lea.sflag [#allocation4], %s758
        %s760 = sand.u32 %s109, 1
        %s761 = smul.addr %s760, 1024
        %s762 = scalar_lea.vmem [#allocation8], %s761
        // Predicated region
        $region52: #{tpu_custom_call.1} parent=31 // pred_check
          %p763 = pneg %p119
        $region53: #{tpu_custom_call.1} parent=31 // pred_check_branch
          %765 = sbr.rel (%p763) target = $region55
        $region54: #{tpu_custom_call.1} parent=31 // pred_region
          %s766 = smul.u32 16, %s23
          %768 = vsyncadd %s759, 0
          %s769 = smul.addr %s766, 8
          %s770 = smul.addr %s769, 8
          %s771 = scalar_lea.hbm %s3, %s770
          %s772 = sshll.u32 %s762, 4
          %s773 = int_to_ptr.vmem [resolvable:$true] %s772
          %s774 = sshll.u32 %s771, 4
          %s775 = int_to_ptr.hbm [resolvable:$true] %s774
          %780 = dma.vmem_to_hbm [thread:$0]  %s773, 16384, %s775, %s759, 128, 128, 8
        $region55: #{tpu_custom_call.1} parent=31 // pred_fallthru
          _
      $region32: #{tpu_custom_call.1} parent=5 // pred_fallthru
        _
      %p781 = scmp.le.s32.totalorder 2, %s18
      // Predicated region
      $region56: #{tpu_custom_call.1} parent=5 // pred_check
        %p782 = pneg %p781
      $region57: #{tpu_custom_call.1} parent=5 // pred_check_branch
        %784 = sbr.rel (%p782) target = $region59
      $region58: #{tpu_custom_call.1} parent=5 // pred_region
        %s785 = ssub.s32 %s18, 2
        // Predicated region
        $region60: #{tpu_custom_call.1} parent=58 // pred_check
          %p786 = pneg %p125
        $region61: #{tpu_custom_call.1} parent=58 // pred_check_branch
          %788 = sbr.rel (%p786) target = $region63
        $region62: #{tpu_custom_call.1} parent=58 // pred_region
          %s789 = sand.u32 %s110, 1
          %s790 = scalar_lea.sflag [#allocation4], %s789
          %s791 = sand.u32 %s110, 1
          %s792 = smul.addr %s791, 1024
          %s793 = scalar_lea.vmem [#allocation8], %s792
          %795 = dma.done %s790, 16384
        $region63: #{tpu_custom_call.1} parent=58 // pred_fallthru
          _
      $region59: #{tpu_custom_call.1} parent=5 // pred_fallthru
        _
    $region6: #{tpu_custom_call.1} parent=1 // loop_footer
      %s22 = sadd.s32 1, %s18
    $region7: #{tpu_custom_call.1} parent=1 // loop_footer_branch
      %17 = sbr.rel target = $region3
    $region8: #{tpu_custom_call.1} parent=1 // loop_exit
      _
    %796 = vsyncpa [#allocation3], 1
    %s797 = scalar_lea.sflag [#allocation3], 1
    %798 = vsyncpa %s797, 1
    %799 = vsyncpa [#allocation6], 1
    %s800 = scalar_lea.sflag [#allocation6], 1
    %801 = vsyncpa %s800, 1
    %802 = vsyncpa [#allocation4], 1
    %s803 = scalar_lea.sflag [#allocation4], 1
    %804 = vsyncpa %s803, 1

</llo_original>
